<compile_context>
chip_gen: v5e
topology: v5e:2x2
jax: 0.10.0
libtpu: 0.0.40
codegen_flags: <defaults>
</compile_context>

<pallas_src>
import functools

import jax
import jax.numpy as jnp
from jax.experimental import pallas as pl
from jax.experimental.pallas import tpu as pltpu

_LANE = 128     # lane width (last dim alignment)
_SUBLANE = 8    # f32 sublane count (second-to-last dim alignment)


def _round_up(n: int, m: int) -> int:
    return ((n + m - 1) // m) * m


# ---------------------------------------------------------------------------
# Fused MLP kernel: all Linear (+LeakyReLU) layers in a single pallas_call.
# bf16 operands on the MXU, f32 accumulation; bias add + LeakyReLU epilogue
# stay in f32 on the accumulator (free VPU slack under the MXU).
# ---------------------------------------------------------------------------
def _fused_mlp_kernel(*refs, activations, negative_slope):
    # refs = (x_ref, w0, b0, w1, b1, ..., o_ref); all shapes (8,128)-padded.
    x_ref, o_ref = refs[0], refs[-1]
    n_layers = len(activations)
    h = x_ref[...]                                  # bf16 (Bp, D0p)
    y = None
    for i, apply_leaky in enumerate(activations):
        w = refs[1 + 2 * i][...]                    # bf16 (Dinp, Doutp)
        b = refs[2 + 2 * i][...]                    # f32  (1, Doutp)
        y = jnp.dot(h, w, preferred_element_type=jnp.float32) + b
        if apply_leaky:                             # f32 LeakyReLU epilogue
            y = jnp.where(y >= 0.0, y, negative_slope * y)
        if i + 1 < n_layers:
            h = y.astype(jnp.bfloat16)              # feed next MXU matmul in bf16
    # Single unmasked, lane-dense store of the padded output slab.
    o_ref[...] = y.astype(o_ref.dtype)


# NOTE: this is a whole-operands-resident-in-VMEM design, appropriate for the
# small layer widths of this module (total weights ~KBs). For large layer
# widths (weights approaching tens of MiB, esp. on v7x with 64 MiB VMEM/TC)
# switch to a gridded, tiled matmul per layer (tm/tn/tk tiles, f32 scratch
# accumulator, "parallel" batch axis) instead of growing these blocks.
@functools.partial(jax.jit, static_argnames=("activations", "out_dim", "negative_slope"))
def mlp_forward(x, weights, biases, *, activations, out_dim, negative_slope=0.01):
    B, indim = x.shape
    Bp = _round_up(max(B, 1), _SUBLANE)
    d0p = weights[0].shape[0]       # padded input width the weights expect
    dlp = weights[-1].shape[1]      # padded final output width

    # Pad batch to a sublane multiple and features to the zero-padded lane
    # width; cast once to bf16 for the MXU. Zero padding is exact: padded
    # weight rows/cols are zero, so padded lanes stay zero through the net.
    x_p = jnp.zeros((Bp, d0p), jnp.bfloat16)
    x_p = x_p.at[:B, :indim].set(x.astype(jnp.bfloat16))

    operands = [x_p]
    for w, b in zip(weights, biases):
        operands.append(w)
        operands.append(b)

    kernel = functools.partial(
        _fused_mlp_kernel, activations=activations, negative_slope=negative_slope
    )

    out_p = pl.pallas_call(
        kernel,
        out_shape=jax.ShapeDtypeStruct((Bp, dlp), jnp.float32),
        # Whole-array VMEM residency (no grid): single kernel invocation.
        in_specs=[pl.BlockSpec(memory_space=pltpu.MemorySpace.VMEM)] * len(operands),
        out_specs=pl.BlockSpec(memory_space=pltpu.MemorySpace.VMEM),
    )(*operands)

    return out_p[:B, :out_dim]


# ---------------------------------------------------------------------------
# Parameter init (matches nn.init.xavier_uniform_ + constant bias)
# ---------------------------------------------------------------------------
def xavier_uniform(key, in_dim, out_dim, dtype=jnp.float32):
    # PyTorch xavier_uniform_: bound = sqrt(6 / (fan_in + fan_out))
    bound = (6.0 / (in_dim + out_dim)) ** 0.5
    return jax.random.uniform(
        key, (in_dim, out_dim), dtype=dtype, minval=-bound, maxval=bound
    )


class NeuralNetworkPallas:
    """JAX/Pallas equivalent of qtable.neuralnetwork.NeuralNetwork.

    Hidden layers: Linear -> LeakyReLU (slope 0.01).
    Final layer (if enddim): Linear only, bias initialized to output_bias.
    Dropout layers are never constructed in the reference module
    (use_dropout defaults to False in FullyConnectedLayer), so none here.
    """

    def __init__(self, indim, enddim, hidden_layers, key, output_bias=0.0,
                 dropout_prob=0.5):
        self.indim = indim
        self.enddim = enddim
        self.dropout_prob = dropout_prob  # unused in forward (as in reference)

        dims = [indim] + list(hidden_layers) + ([enddim] if enddim else [])
        acts = [True] * len(hidden_layers) + ([False] if enddim else [])
        self.dims = dims
        self.activations = tuple(acts)
        self.out_dim = dims[-1]

        weights, biases = [], []
        for i, apply_leaky in enumerate(acts):
            din, dout = dims[i], dims[i + 1]
            key, sub = jax.random.split(key)
            w = xavier_uniform(sub, din, dout)                   # f32 init (PyTorch)
            bval = 0.0 if apply_leaky else float(output_bias)    # hidden=0, final=output_bias
            dinp, doutp = _round_up(din, _LANE), _round_up(dout, _LANE)
            wp = jnp.zeros((dinp, doutp), jnp.bfloat16)
            wp = wp.at[:din, :dout].set(w.astype(jnp.bfloat16))  # bf16 for the MXU
            bp = jnp.zeros((1, doutp), jnp.float32)
            bp = bp.at[0, :dout].set(jnp.full((dout,), bval, jnp.float32))
            weights.append(wp)
            biases.append(bp)
        self.weights = tuple(weights)
        self.biases = tuple(biases)

    def __call__(self, x):
        return mlp_forward(
            x, self.weights, self.biases,
            activations=self.activations, out_dim=self.out_dim,
        )


if __name__ == "__main__":
    key = jax.random.PRNGKey(0)
    key, xkey, pkey = jax.random.split(key, 3)

    # Small shapes consistent with the module's forward: x is (batch, indim).
    batch, indim, enddim = 4, 16, 8
    hidden_layers = [32, 32]

    net = NeuralNetworkPallas(indim, enddim, hidden_layers, pkey, output_bias=0.0)
    x = jax.random.normal(xkey, (batch, indim), dtype=jnp.float32)

    out = net(x)
    jax.block_until_ready(out)
    assert out.shape == (batch, enddim), out.shape

    # Pure-JAX reference mirroring the kernel math exactly:
    # bf16 matmul operands, f32 accumulation, f32 bias + LeakyReLU epilogue.
    dims = net.dims
    h = x.astype(jnp.bfloat16)
    y = None
    for i, act in enumerate(net.activations):
        w = net.weights[i][:dims[i], :dims[i + 1]]
        b = net.biases[i][:, :dims[i + 1]]
        y = jnp.dot(h, w, preferred_element_type=jnp.float32) + b
        if act:
            y = jnp.where(y >= 0.0, y, 0.01 * y)
        if i + 1 < len(net.activations):
            h = y.astype(jnp.bfloat16)
    ref = y
    assert jnp.allclose(out, ref, atol=1e-3, rtol=1e-3), float(jnp.max(jnp.abs(out - ref)))

    print("KERNEL_OK")
</pallas_src>

<mosaic_0001>
module attributes {stable_mosaic.version = 11 : i64} {
  func.func @_fused_mlp_kernel(%arg0: memref<8x128xbf16, #tpu.memory_space<vmem>>, %arg1: memref<128x128xbf16, #tpu.memory_space<vmem>>, %arg2: memref<1x128xf32, #tpu.memory_space<vmem>>, %arg3: memref<128x128xbf16, #tpu.memory_space<vmem>>, %arg4: memref<1x128xf32, #tpu.memory_space<vmem>>, %arg5: memref<128x128xbf16, #tpu.memory_space<vmem>>, %arg6: memref<1x128xf32, #tpu.memory_space<vmem>>, %arg7: memref<8x128xf32, #tpu.memory_space<vmem>>) attributes {dimension_semantics = [], scalar_prefetch = 0 : i64, scratch_operands = 0 : i64, tpu.core_type = #tpu.core_type<tc>} {
    %c0 = arith.constant 0 : index
    %c0_0 = arith.constant 0 : index
    %0 = vector.load %arg0[%c0, %c0_0] : memref<8x128xbf16, #tpu.memory_space<vmem>>, vector<8x128xbf16>
    %c0_1 = arith.constant 0 : index
    %c0_2 = arith.constant 0 : index
    %1 = vector.load %arg1[%c0_1, %c0_2] : memref<128x128xbf16, #tpu.memory_space<vmem>>, vector<128x128xbf16>
    %c0_3 = arith.constant 0 : index
    %c0_4 = arith.constant 0 : index
    %2 = vector.load %arg2[%c0_3, %c0_4] : memref<1x128xf32, #tpu.memory_space<vmem>>, vector<1x128xf32>
    %cst = arith.constant dense<0.000000e+00> : vector<8x128xf32>
    %3 = tpu.matmul %0, %1, %cst {dimension_numbers = #tpu.dot_dimension_numbers<[1], [0], [0], [1], [0, 0, 1, 1], [], []>} : vector<8x128xbf16>, vector<128x128xbf16>, vector<8x128xf32> -> vector<8x128xf32>
    %4 = vector.broadcast %2 : vector<1x128xf32> to vector<8x128xf32>
    %5 = arith.addf %3, %4 : vector<8x128xf32>
    %cst_5 = arith.constant 0.000000e+00 : f32
    %6 = vector.broadcast %cst_5 : f32 to vector<8x128xf32>
    %7 = arith.cmpf oge, %5, %6 : vector<8x128xf32>
    %cst_6 = arith.constant 0.00999999977 : f32
    %8 = vector.broadcast %cst_6 : f32 to vector<8x128xf32>
    %9 = arith.mulf %8, %5 : vector<8x128xf32>
    %10 = arith.select %7, %5, %9 : vector<8x128xi1>, vector<8x128xf32>
    %11 = arith.truncf %10 : vector<8x128xf32> to vector<8x128xbf16>
    %c0_7 = arith.constant 0 : index
    %c0_8 = arith.constant 0 : index
    %12 = vector.load %arg3[%c0_7, %c0_8] : memref<128x128xbf16, #tpu.memory_space<vmem>>, vector<128x128xbf16>
    %c0_9 = arith.constant 0 : index
    %c0_10 = arith.constant 0 : index
    %13 = vector.load %arg4[%c0_9, %c0_10] : memref<1x128xf32, #tpu.memory_space<vmem>>, vector<1x128xf32>
    %cst_11 = arith.constant dense<0.000000e+00> : vector<8x128xf32>
    %14 = tpu.matmul %11, %12, %cst_11 {dimension_numbers = #tpu.dot_dimension_numbers<[1], [0], [0], [1], [0, 0, 1, 1], [], []>} : vector<8x128xbf16>, vector<128x128xbf16>, vector<8x128xf32> -> vector<8x128xf32>
    %15 = vector.broadcast %13 : vector<1x128xf32> to vector<8x128xf32>
    %16 = arith.addf %14, %15 : vector<8x128xf32>
    %cst_12 = arith.constant 0.000000e+00 : f32
    %17 = vector.broadcast %cst_12 : f32 to vector<8x128xf32>
    %18 = arith.cmpf oge, %16, %17 : vector<8x128xf32>
    %cst_13 = arith.constant 0.00999999977 : f32
    %19 = vector.broadcast %cst_13 : f32 to vector<8x128xf32>
    %20 = arith.mulf %19, %16 : vector<8x128xf32>
    %21 = arith.select %18, %16, %20 : vector<8x128xi1>, vector<8x128xf32>
    %22 = arith.truncf %21 : vector<8x128xf32> to vector<8x128xbf16>
    %c0_14 = arith.constant 0 : index
    %c0_15 = arith.constant 0 : index
    %23 = vector.load %arg5[%c0_14, %c0_15] : memref<128x128xbf16, #tpu.memory_space<vmem>>, vector<128x128xbf16>
    %c0_16 = arith.constant 0 : index
    %c0_17 = arith.constant 0 : index
    %24 = vector.load %arg6[%c0_16, %c0_17] : memref<1x128xf32, #tpu.memory_space<vmem>>, vector<1x128xf32>
    %cst_18 = arith.constant dense<0.000000e+00> : vector<8x128xf32>
    %25 = tpu.matmul %22, %23, %cst_18 {dimension_numbers = #tpu.dot_dimension_numbers<[1], [0], [0], [1], [0, 0, 1, 1], [], []>} : vector<8x128xbf16>, vector<128x128xbf16>, vector<8x128xf32> -> vector<8x128xf32>
    %26 = vector.broadcast %24 : vector<1x128xf32> to vector<8x128xf32>
    %27 = arith.addf %25, %26 : vector<8x128xf32>
    %c0_19 = arith.constant 0 : index
    %c0_20 = arith.constant 0 : index
    %28 = vector.load %arg7[%c0_19, %c0_20] : memref<8x128xf32, #tpu.memory_space<vmem>>, vector<8x128xf32>
    tpu.vector_store %arg7[%c0_19, %c0_20], %27 {strides = array<i32>} : memref<8x128xf32, #tpu.memory_space<vmem>>, vector<8x128xf32>,
    return
  }
}

</mosaic_0001>

<llo_original>
// kernel: mlp_forward.1
$region0: #{mlp_forward.1}
  #allocation0 [shape = 'u32[]', space=smem, size = 0x4, offset = 0x4, fixed_abs, tag = 'smem constant byte address 0x4 - core index']
  #allocation1 [shape = 'u32[72,128]{1,0:T(1,128)}', space=vmem, size = 0x9000, scoped, tag = 'internal scratch']
  %s0 = inlined_call_operand.vmem [shape: bf16[8,128], index: 0, kind: input, shape index: {}]
  %s1 = inlined_call_operand.hbm [shape: bf16[128,128], index: 1, kind: input, shape index: {}]
  %s2 = inlined_call_operand.vmem [shape: f32[1,128], index: 2, kind: input, shape index: {}]
  %s3 = inlined_call_operand.hbm [shape: bf16[128,128], index: 3, kind: input, shape index: {}]
  %s4 = inlined_call_operand.vmem [shape: f32[1,128], index: 4, kind: input, shape index: {}]
  %s5 = inlined_call_operand.hbm [shape: bf16[128,128], index: 5, kind: input, shape index: {}]
  %s6 = inlined_call_operand.vmem [shape: f32[1,128], index: 6, kind: input, shape index: {}]
  %s7 = inlined_call_operand.vmem [shape: f32[8,128], index: 7, kind: output, shape index: {}]
  %s8 = sld [smem:[#allocation0]]
  $region50: #{mlp_forward.1} parent=0
    _
  %s10 = ssub.s32 1, %s8
  %s11 = scalar_select 0, %s10, %s8
  $region1: #{mlp_forward.1} parent=0
    #allocation2 [shape = 'u8[32768]{0}', space=vmem, size = 0x8000, scoped, tag = 'input window, operand 1, single buffered']
    #allocation3 [shape = 's32[1]{0}', space=sflag, size = 0x4, scoped, tag = 'scoped memory for mlp_forward.1']
    #allocation4 [shape = 'u8[32768]{0}', space=vmem, size = 0x8000, scoped, tag = 'input window, operand 3, single buffered']
    #allocation5 [shape = 's32[1]{0}', space=sflag, size = 0x4, scoped, tag = 'scoped memory for mlp_forward.1']
    #allocation6 [shape = 'u8[32768]{0}', space=vmem, size = 0x8000, scoped, tag = 'input window, operand 5, single buffered']
    %12 = vsyncpa [#allocation3], 0
    %13 = vsyncpa [#allocation5], 0
    // Predicated region
    $region2: #{mlp_forward.1} parent=1 // pred_check
      _
    $region3: #{mlp_forward.1} parent=1 // pred_check_branch
      %15 = sbr.rel (0) target = $region5
    $region4: #{mlp_forward.1} parent=1 // pred_region
      _
    $region5: #{mlp_forward.1} parent=1 // pred_fallthru
      _
    // Predicated region
    $region6: #{mlp_forward.1} parent=1 // pred_check
      _
    $region7: #{mlp_forward.1} parent=1 // pred_check_branch
      %17 = sbr.rel (0) target = $region9
    $region8: #{mlp_forward.1} parent=1 // pred_region
      %19 = vsyncadd [#allocation3], 0
      %s20 = sshll.u32 %s1, 4
      %s21 = int_to_ptr.hbm [resolvable:$true] %s20
      %s22 = sshll.u32 [#allocation2], 4
      %s23 = int_to_ptr.vmem [resolvable:$true] %s22
      %28 = dma.hbm_to_vmem [thread:$0]  %s21, 1024, %s23, [#allocation3], 64, 64, 4
    $region9: #{mlp_forward.1} parent=1 // pred_fallthru
      _
    // Predicated region
    $region10: #{mlp_forward.1} parent=1 // pred_check
      _
    $region11: #{mlp_forward.1} parent=1 // pred_check_branch
      %30 = sbr.rel (0) target = $region13
    $region12: #{mlp_forward.1} parent=1 // pred_region
      _
    $region13: #{mlp_forward.1} parent=1 // pred_fallthru
      _
    // Predicated region
    $region14: #{mlp_forward.1} parent=1 // pred_check
      _
    $region15: #{mlp_forward.1} parent=1 // pred_check_branch
      %32 = sbr.rel (0) target = $region17
    $region16: #{mlp_forward.1} parent=1 // pred_region
      %34 = vsyncadd [#allocation5], 0
      %s35 = sshll.u32 %s3, 4
      %s36 = int_to_ptr.hbm [resolvable:$true] %s35
      %s37 = sshll.u32 [#allocation4], 4
      %s38 = int_to_ptr.vmem [resolvable:$true] %s37
      %43 = dma.hbm_to_vmem [thread:$0]  %s36, 1024, %s38, [#allocation5], 64, 64, 4
    $region17: #{mlp_forward.1} parent=1 // pred_fallthru
      _
    // Predicated region
    $region18: #{mlp_forward.1} parent=1 // pred_check
      _
    $region19: #{mlp_forward.1} parent=1 // pred_check_branch
      %45 = sbr.rel (0) target = $region21
    $region20: #{mlp_forward.1} parent=1 // pred_region
      _
    $region21: #{mlp_forward.1} parent=1 // pred_fallthru
      _
    // Predicated region
    $region22: #{mlp_forward.1} parent=1 // pred_check
      _
    $region23: #{mlp_forward.1} parent=1 // pred_check_branch
      %47 = sbr.rel (0) target = $region25
    $region24: #{mlp_forward.1} parent=1 // pred_region
      %49 = vsyncadd [#allocation5], 0
      %s50 = sshll.u32 %s5, 4
      %s51 = int_to_ptr.hbm [resolvable:$true] %s50
      %s52 = sshll.u32 [#allocation6], 4
      %s53 = int_to_ptr.vmem [resolvable:$true] %s52
      %58 = dma.hbm_to_vmem [thread:$0]  %s51, 1024, %s53, [#allocation5], 64, 64, 4
    $region25: #{mlp_forward.1} parent=1 // pred_fallthru
      _
    // Predicated region
    $region26: #{mlp_forward.1} parent=1 // pred_check
      _
    $region27: #{mlp_forward.1} parent=1 // pred_check_branch
      %60 = sbr.rel (0) target = $region29
    $region28: #{mlp_forward.1} parent=1 // pred_region
      _
    $region29: #{mlp_forward.1} parent=1 // pred_fallthru
      _
    // Predicated region
    $region30: #{mlp_forward.1} parent=1 // pred_check
      _
    $region31: #{mlp_forward.1} parent=1 // pred_check_branch
      %62 = sbr.rel (0) target = $region33
    $region32: #{mlp_forward.1} parent=1 // pred_region
      %64 = dma.done [#allocation3], 1024
    $region33: #{mlp_forward.1} parent=1 // pred_fallthru
      _
    // Predicated region
    $region34: #{mlp_forward.1} parent=1 // pred_check
      _
    $region35: #{mlp_forward.1} parent=1 // pred_check_branch
      %66 = sbr.rel (0) target = $region37
    $region36: #{mlp_forward.1} parent=1 // pred_region
      %68 = dma.done [#allocation5], 1024
    $region37: #{mlp_forward.1} parent=1 // pred_fallthru
      _
    // Predicated region
    $region38: #{mlp_forward.1} parent=1 // pred_check
      _
    $region39: #{mlp_forward.1} parent=1 // pred_check_branch
      %70 = sbr.rel (0) target = $region41
    $region40: #{mlp_forward.1} parent=1 // pred_region
      %72 = dma.done [#allocation5], 1024
    $region41: #{mlp_forward.1} parent=1 // pred_fallthru
      _
    %v73 = vld [vmem:[%s0] sm:$0xf]
    %v74 = vld [vmem:[#allocation2] sm:$0xf]
    %v75 = vld [vmem:[#allocation2 + $0x4] sm:$0xf]
    %v76 = vld [vmem:[#allocation2 + $0x8] sm:$0xf]
    %v77 = vld [vmem:[#allocation2 + $0xc] sm:$0xf]
    %v78 = vld [vmem:[#allocation2 + $0x10] sm:$0xf]
    %v79 = vld [vmem:[#allocation2 + $0x14] sm:$0xf]
    %v80 = vld [vmem:[#allocation2 + $0x18] sm:$0xf]
    %v81 = vld [vmem:[#allocation2 + $0x1c] sm:$0xf]
    %v82 = vld [vmem:[#allocation2 + $0x20] sm:$0xf]
    %v83 = vld [vmem:[#allocation2 + $0x24] sm:$0xf]
    %v84 = vld [vmem:[#allocation2 + $0x28] sm:$0xf]
    %v85 = vld [vmem:[#allocation2 + $0x2c] sm:$0xf]
    %v86 = vld [vmem:[#allocation2 + $0x30] sm:$0xf]
    %v87 = vld [vmem:[#allocation2 + $0x34] sm:$0xf]
    %v88 = vld [vmem:[#allocation2 + $0x38] sm:$0xf]
    %v89 = vld [vmem:[#allocation2 + $0x3c] sm:$0xf]
    %v90 = vld [vmem:[%s2] sm:$0x1]
    %v92 = vperm.slane %v90, 0
    %v110 = vunpack.c.l.b16 %v74
    %v111 = vunpack.c.l.b16 %v75
    %v112 = vunpack.c.l.b16 %v76
    %v113 = vunpack.c.l.b16 %v77
    %v114 = vunpack.c.l.b16 %v78
    %v115 = vunpack.c.l.b16 %v79
    %v116 = vunpack.c.l.b16 %v80
    %v117 = vunpack.c.l.b16 %v81
    %v118 = vunpack.c.l.b16 %v82
    %v119 = vunpack.c.l.b16 %v83
    %v120 = vunpack.c.l.b16 %v84
    %v121 = vunpack.c.l.b16 %v85
    %v122 = vunpack.c.l.b16 %v86
    %v123 = vunpack.c.l.b16 %v87
    %v124 = vunpack.c.l.b16 %v88
    %v125 = vunpack.c.l.b16 %v89
    %v126 = vpack.c.b16 %v111, %v110
    %v127 = vpack.c.b16 %v113, %v112
    %v128 = vpack.c.b16 %v115, %v114
    %v129 = vpack.c.b16 %v117, %v116
    %v130 = vpack.c.b16 %v119, %v118
    %v131 = vpack.c.b16 %v121, %v120
    %v132 = vpack.c.b16 %v123, %v122
    %v133 = vpack.c.b16 %v125, %v124
    %142 = vmatpush.bf16.msra.mxu0 %v133
    %143 = vmatpush.bf16.msra.mxu0 %v132
    %144 = vmatpush.bf16.msra.mxu0 %v131
    %145 = vmatpush.bf16.msra.mxu0 %v130
    %146 = vmatpush.bf16.msra.mxu0 %v129
    %147 = vmatpush.bf16.msra.mxu0 %v128
    %148 = vmatpush.bf16.msra.mxu0 %v127
    %149 = vmatpush.bf16.msra.mxu0 %v126
    %150 = vmatmul.bf16.gmra.mxu0 %v73
    %v151 = vpop.f32.mrf.mxu0
    %v152 = vadd.f32 %v92, %v151
    %v153 = vpop.f32.mrf.mxu0
    %154 = vdwg.mxu0
    %vm155 = vcmp.ge.f32.partialorder %v152, 0.0
    %v156 = vmul.f32 %v152, 0.01
    %v157 = vsel %vm155, %v152, %v156
    %v158 = vpack.c.bf16 %v157, %v157
    %v159 = vld [vmem:[#allocation4] sm:$0xf]
    %v160 = vld [vmem:[#allocation4 + $0x4] sm:$0xf]
    %v161 = vld [vmem:[#allocation4 + $0x8] sm:$0xf]
    %v162 = vld [vmem:[#allocation4 + $0xc] sm:$0xf]
    %v163 = vld [vmem:[#allocation4 + $0x10] sm:$0xf]
    %v164 = vld [vmem:[#allocation4 + $0x14] sm:$0xf]
    %v165 = vld [vmem:[#allocation4 + $0x18] sm:$0xf]
    %v166 = vld [vmem:[#allocation4 + $0x1c] sm:$0xf]
    %v167 = vld [vmem:[#allocation4 + $0x20] sm:$0xf]
    %v168 = vld [vmem:[#allocation4 + $0x24] sm:$0xf]
    %v169 = vld [vmem:[#allocation4 + $0x28] sm:$0xf]
    %v170 = vld [vmem:[#allocation4 + $0x2c] sm:$0xf]
    %v171 = vld [vmem:[#allocation4 + $0x30] sm:$0xf]
    %v172 = vld [vmem:[#allocation4 + $0x34] sm:$0xf]
    %v173 = vld [vmem:[#allocation4 + $0x38] sm:$0xf]
    %v174 = vld [vmem:[#allocation4 + $0x3c] sm:$0xf]
    %v175 = vld [vmem:[%s4] sm:$0x1]
    %v177 = vperm.slane %v175, 0
    %v195 = vunpack.c.l.b16 %v159
    %v196 = vunpack.c.l.b16 %v160
    %v197 = vunpack.c.l.b16 %v161
    %v198 = vunpack.c.l.b16 %v162
    %v199 = vunpack.c.l.b16 %v163
    %v200 = vunpack.c.l.b16 %v164
    %v201 = vunpack.c.l.b16 %v165
    %v202 = vunpack.c.l.b16 %v166
    %v203 = vunpack.c.l.b16 %v167
    %v204 = vunpack.c.l.b16 %v168
    %v205 = vunpack.c.l.b16 %v169
    %v206 = vunpack.c.l.b16 %v170
    %v207 = vunpack.c.l.b16 %v171
    %v208 = vunpack.c.l.b16 %v172
    %v209 = vunpack.c.l.b16 %v173
    %v210 = vunpack.c.l.b16 %v174
    %v211 = vpack.c.b16 %v196, %v195
    %v212 = vpack.c.b16 %v198, %v197
    %v213 = vpack.c.b16 %v200, %v199
    %v214 = vpack.c.b16 %v202, %v201
    %v215 = vpack.c.b16 %v204, %v203
    %v216 = vpack.c.b16 %v206, %v205
    %v217 = vpack.c.b16 %v208, %v207
    %v218 = vpack.c.b16 %v210, %v209
    %227 = vmatpush.bf16.msra.mxu0 %v218
    %228 = vmatpush.bf16.msra.mxu0 %v217
    %229 = vmatpush.bf16.msra.mxu0 %v216
    %230 = vmatpush.bf16.msra.mxu0 %v215
    %231 = vmatpush.bf16.msra.mxu0 %v214
    %232 = vmatpush.bf16.msra.mxu0 %v213
    %233 = vmatpush.bf16.msra.mxu0 %v212
    %234 = vmatpush.bf16.msra.mxu0 %v211
    %235 = vmatmul.bf16.gmra.mxu0 %v158
    %v236 = vpop.f32.mrf.mxu0
    %v237 = vadd.f32 %v177, %v236
    %v238 = vpop.f32.mrf.mxu0
    %239 = vdwg.mxu0
    %vm240 = vcmp.ge.f32.partialorder %v237, 0.0
    %v241 = vmul.f32 %v237, 0.01
    %v242 = vsel %vm240, %v237, %v241
    %v243 = vpack.c.bf16 %v242, %v242
    %v244 = vld [vmem:[#allocation6] sm:$0xf]
    %v245 = vld [vmem:[#allocation6 + $0x4] sm:$0xf]
    %v246 = vld [vmem:[#allocation6 + $0x8] sm:$0xf]
    %v247 = vld [vmem:[#allocation6 + $0xc] sm:$0xf]
    %v248 = vld [vmem:[#allocation6 + $0x10] sm:$0xf]
    %v249 = vld [vmem:[#allocation6 + $0x14] sm:$0xf]
    %v250 = vld [vmem:[#allocation6 + $0x18] sm:$0xf]
    %v251 = vld [vmem:[#allocation6 + $0x1c] sm:$0xf]
    %v252 = vld [vmem:[#allocation6 + $0x20] sm:$0xf]
    %v253 = vld [vmem:[#allocation6 + $0x24] sm:$0xf]
    %v254 = vld [vmem:[#allocation6 + $0x28] sm:$0xf]
    %v255 = vld [vmem:[#allocation6 + $0x2c] sm:$0xf]
    %v256 = vld [vmem:[#allocation6 + $0x30] sm:$0xf]
    %v257 = vld [vmem:[#allocation6 + $0x34] sm:$0xf]
    %v258 = vld [vmem:[#allocation6 + $0x38] sm:$0xf]
    %v259 = vld [vmem:[#allocation6 + $0x3c] sm:$0xf]
    %v260 = vld [vmem:[%s6] sm:$0x1]
    %v262 = vperm.slane %v260, 0
    %v280 = vunpack.c.l.b16 %v244
    %v281 = vunpack.c.l.b16 %v245
    %v282 = vunpack.c.l.b16 %v246
    %v283 = vunpack.c.l.b16 %v247
    %v284 = vunpack.c.l.b16 %v248
    %v285 = vunpack.c.l.b16 %v249
    %v286 = vunpack.c.l.b16 %v250
    %v287 = vunpack.c.l.b16 %v251
    %v288 = vunpack.c.l.b16 %v252
    %v289 = vunpack.c.l.b16 %v253
    %v290 = vunpack.c.l.b16 %v254
    %v291 = vunpack.c.l.b16 %v255
    %v292 = vunpack.c.l.b16 %v256
    %v293 = vunpack.c.l.b16 %v257
    %v294 = vunpack.c.l.b16 %v258
    %v295 = vunpack.c.l.b16 %v259
    %v296 = vpack.c.b16 %v281, %v280
    %v297 = vpack.c.b16 %v283, %v282
    %v298 = vpack.c.b16 %v285, %v284
    %v299 = vpack.c.b16 %v287, %v286
    %v300 = vpack.c.b16 %v289, %v288
    %v301 = vpack.c.b16 %v291, %v290
    %v302 = vpack.c.b16 %v293, %v292
    %v303 = vpack.c.b16 %v295, %v294
    %312 = vmatpush.bf16.msra.mxu0 %v303
    %313 = vmatpush.bf16.msra.mxu0 %v302
    %314 = vmatpush.bf16.msra.mxu0 %v301
    %315 = vmatpush.bf16.msra.mxu0 %v300
    %316 = vmatpush.bf16.msra.mxu0 %v299
    %317 = vmatpush.bf16.msra.mxu0 %v298
    %318 = vmatpush.bf16.msra.mxu0 %v297
    %319 = vmatpush.bf16.msra.mxu0 %v296
    %320 = vmatmul.bf16.gmra.mxu0 %v243
    %v321 = vpop.f32.mrf.mxu0
    %v322 = vadd.f32 %v262, %v321
    %v323 = vpop.f32.mrf.mxu0
    %324 = vdwg.mxu0
    %325 = vst [vmem:[%s7] sm:$0xff] %v322
    // Predicated region
    $region42: #{mlp_forward.1} parent=1 // pred_check
      _
    $region43: #{mlp_forward.1} parent=1 // pred_check_branch
      %327 = sbr.rel (0) target = $region45
    $region44: #{mlp_forward.1} parent=1 // pred_region
      _
    $region45: #{mlp_forward.1} parent=1 // pred_fallthru
      _
    // Predicated region
    $region46: #{mlp_forward.1} parent=1 // pred_check
      _
    $region47: #{mlp_forward.1} parent=1 // pred_check_branch
      %329 = sbr.rel (0) target = $region49
    $region48: #{mlp_forward.1} parent=1 // pred_region
      _
    $region49: #{mlp_forward.1} parent=1 // pred_fallthru
      _
    %330 = vsyncpa [#allocation3], 1
    %331 = vsyncpa [#allocation5], 1

</llo_original>
